<compile_context>
chip_gen: v7x
topology: tpu7x:2x2x1
jax: 0.10.0
libtpu: 0.0.40
codegen_flags: <defaults>
</compile_context>

<pallas_src>
import jax
import jax.numpy as jnp
import numpy as np
from jax.experimental import pallas as pl
from jax.experimental.pallas import tpu as pltpu

EPS = 1e-5


def _bn_scale_shift(h, gamma, beta, inv_count):
    """Training-mode BatchNorm folded into a per-channel (scale, shift).

    h: (C', N*L) activations; statistics over the folded lane axis.
    Biased variance (PyTorch normalisation path), single pass
    var = E[h^2] - mean^2, clamped >= 0 against cancellation.
    y = h * scale + shift.
    """
    s = jnp.sum(h, axis=1, keepdims=True)
    ss = jnp.sum(h * h, axis=1, keepdims=True)
    mean = s * inv_count
    var = jnp.maximum(ss * inv_count - mean * mean, 0.0)
    scale = gamma * jax.lax.rsqrt(var + EPS)
    shift = beta - mean * scale
    return scale, shift


def _bottleneck_kernel(
    x_ref,                  # (N, C, L)        f32  input (lane axis = L)
    mprev_ref, mnext_ref,   # (1, N*L)         f32  per-sample conv boundary masks
    wpre_ref,               # (CmidP, C)       f32  conv_pre 1x1 weight (rows zero-padded)
    w1_ref,                 # (CmidP, 3*CmidP) f32  fused conv1 weight [k=0 | k=1 | k=2]
    wpost_ref,              # (C, CmidP)       f32  conv_post 1x1 weight (cols zero-padded)
    g1_ref, b1_ref,         # (CmidP, 1)       f32  BN1 affine (padding rows = 0)
    g2_ref, b2_ref,         # (CmidP, 1)       f32  BN2 affine
    g3_ref, b3_ref,         # (C, 1)           f32  BN3 affine
    o_ref,                  # (N, C, L)        f32  output
):
    n, _, l = x_ref.shape
    nl = n * l
    inv_count = 1.0 / float(nl)

    # Fold the batch into the lane axis: one lane-dense (C, N*L) activation.
    # L is a multiple of 128, so the concatenation is lane-tile aligned.
    xc = jnp.concatenate([x_ref[i] for i in range(n)], axis=1)            # (C, NL)

    m_prev = mprev_ref[...]     # zero at t == 0   of every sample
    m_next = mnext_ref[...]     # zero at t == L-1 of every sample

    # Weights read exactly once.
    wpre = wpre_ref[...]
    w1 = w1_ref[...]
    wpost = wpost_ref[...]

    # ---- stage 1: conv_pre (1x1 == channel matmul) + BN1 + ReLU --------------
    h1 = jnp.dot(wpre, xc, preferred_element_type=jnp.float32)            # (CmidP, NL)
    sc1, sh1 = _bn_scale_shift(h1, g1_ref[...], b1_ref[...], inv_count)
    a1 = jnp.maximum(h1 * sc1 + sh1, 0.0)

    # ---- stage 2: conv1 (k=3, pad=1) as ONE matmul over a stacked operand ----
    prev = pltpu.roll(a1, shift=1, axis=1) * m_prev                       # x(t-1)
    nxt = pltpu.roll(a1, shift=nl - 1, axis=1) * m_next                   # x(t+1)
    stk = jnp.concatenate([prev, a1, nxt], axis=0)                        # (3*CmidP, NL)
    h2 = jnp.dot(w1, stk, preferred_element_type=jnp.float32)             # (CmidP, NL)
    sc2, sh2 = _bn_scale_shift(h2, g2_ref[...], b2_ref[...], inv_count)
    a2 = jnp.maximum(h2 * sc2 + sh2, 0.0)

    # ---- stage 3: conv_post (1x1) + BN3 ---------------------------------------
    h3 = jnp.dot(wpost, a2, preferred_element_type=jnp.float32)           # (C, NL)
    sc3, sh3 = _bn_scale_shift(h3, g3_ref[...], b3_ref[...], inv_count)
    y = h3 * sc3 + sh3

    # ---- stage 4: residual add, per-sample lane-dense (C, L) stores -----------
    for i in range(n):
        o_ref[i] = x_ref[i] + y[:, i * l:(i + 1) * l]


def _round_up(v, m):
    return (v + m - 1) // m * m


def _vmem_limit_bytes():
    """Per-generation VMEM ceiling (leave headroom for compiler/DMA buffers)."""
    try:
        cap = int(pltpu.get_tpu_info().vmem_capacity_bytes)
        return int(min(cap * 3 // 4, 100 * 1024 * 1024))
    except Exception:
        return 32 * 1024 * 1024


@jax.jit
def residual_bottleneck_pallas(x_ncl, params):
    """x_ncl: (N, C, L) float32 (PyTorch Conv1d layout). Returns (N, C, L) f32."""
    n, c, seq = x_ncl.shape
    w_pre, w1, w_post = params["w_pre"], params["w1"], params["w_post"]
    cmid = w_pre.shape[0]
    cout = w_post.shape[0]
    assert cout == c, "residual add requires in_channels == out_channels"
    assert c % 8 == 0, "channel count must be a multiple of the sublane granule"

    # Pad mid channels to the f32 sublane granule so every tile is unmasked.
    cmidp = max(8, _round_up(cmid, 8))
    pad_mid = cmidp - cmid

    wpre = jnp.pad(w_pre[:, :, 0].astype(jnp.float32), ((0, pad_mid), (0, 0)))     # (CmidP, C)
    taps = [jnp.pad(w1[:, :, k].astype(jnp.float32), ((0, pad_mid), (0, pad_mid)))
            for k in range(3)]
    w1f = jnp.concatenate(taps, axis=1)                                             # (CmidP, 3*CmidP)
    wpost = jnp.pad(w_post[:, :, 0].astype(jnp.float32), ((0, 0), (0, pad_mid)))    # (C, CmidP)

    def _vec(v, rows):
        v = v.reshape(-1, 1).astype(jnp.float32)
        return jnp.pad(v, ((0, rows - v.shape[0]), (0, 0)))

    g1, b1 = _vec(params["g1"], cmidp), _vec(params["b1"], cmidp)
    g2, b2 = _vec(params["g2"], cmidp), _vec(params["b2"], cmidp)
    g3, b3 = _vec(params["g3"], c), _vec(params["b3"], c)

    # Static per-sample conv boundary masks on the folded (N*L) lane axis.
    t = jnp.arange(n * seq, dtype=jnp.int32) % seq
    m_prev = (t > 0).astype(jnp.float32).reshape(1, n * seq)
    m_next = (t < seq - 1).astype(jnp.float32).reshape(1, n * seq)

    vmem = pl.BlockSpec(memory_space=pltpu.MemorySpace.VMEM)
    return pl.pallas_call(
        _bottleneck_kernel,
        out_shape=jax.ShapeDtypeStruct((n, c, seq), jnp.float32),
        in_specs=[vmem] * 12,
        out_specs=vmem,
        compiler_params=pltpu.CompilerParams(vmem_limit_bytes=_vmem_limit_bytes()),
    )(x_ncl.astype(jnp.float32), m_prev, m_next, wpre, w1f, wpost,
      g1, b1, g2, b2, g3, b3)


# ------------------------- pure-JAX reference (NCL, f32) ----------------------
def residual_bottleneck_ref(x, params):
    def conv1d(h, w, pad):
        return jax.lax.conv_general_dilated(
            h, w, window_strides=(1,), padding=[(pad, pad)],
            dimension_numbers=("NCH", "OIH", "NCH"))

    def bn(h, g, b):
        mean = h.mean(axis=(0, 2), keepdims=True)
        var = ((h - mean) ** 2).mean(axis=(0, 2), keepdims=True)
        return (h - mean) * jax.lax.rsqrt(var + EPS) * g[None, :, None] + b[None, :, None]

    out = conv1d(x, params["w_pre"], 0)
    out = jnp.maximum(bn(out, params["g1"], params["b1"]), 0.0)
    out = conv1d(out, params["w1"], 1)
    out = jnp.maximum(bn(out, params["g2"], params["b2"]), 0.0)
    out = conv1d(out, params["w_post"], 0)
    out = bn(out, params["g3"], params["b3"])
    return x + out


if __name__ == "__main__":
    # Shapes consistent with the module: first-stage channels = 16,
    # compression 4 -> C_mid = 4, kernel_size=3 / padding=1, stride=1.
    # L = 256 keeps the folded lane extent N*L = 512 (multiple of 256).
    N, C, L = 2, 16, 256
    CMID = C // 4

    key = jax.random.PRNGKey(0)
    ks = jax.random.split(key, 10)
    params = {
        "w_pre":  0.2 * jax.random.normal(ks[0], (CMID, C, 1), jnp.float32),
        "w1":     0.2 * jax.random.normal(ks[1], (CMID, CMID, 3), jnp.float32),
        "w_post": 0.2 * jax.random.normal(ks[2], (C, CMID, 1), jnp.float32),
        "g1": 1.0 + 0.1 * jax.random.normal(ks[3], (CMID,), jnp.float32),
        "b1": 0.1 * jax.random.normal(ks[4], (CMID,), jnp.float32),
        "g2": 1.0 + 0.1 * jax.random.normal(ks[5], (CMID,), jnp.float32),
        "b2": 0.1 * jax.random.normal(ks[6], (CMID,), jnp.float32),
        "g3": 1.0 + 0.1 * jax.random.normal(ks[7], (C,), jnp.float32),
        "b3": 0.1 * jax.random.normal(ks[8], (C,), jnp.float32),
    }
    x = jax.random.normal(ks[9], (N, C, L), jnp.float32)

    ref = jax.block_until_ready(residual_bottleneck_ref(x, params))
    out = jax.block_until_ready(residual_bottleneck_pallas(x, params))

    # Kernel is full f32 (f32 matmul operands + accumulation); only reduction
    # order / folded-BN rounding differs from the reference.
    np.testing.assert_allclose(np.asarray(out), np.asarray(ref), rtol=5e-3, atol=5e-3)
    print("KERNEL_OK")
</pallas_src>

<mosaic_0001>
module attributes {stable_mosaic.version = 11 : i64} {
  func.func @_bottleneck_kernel(%arg0: memref<2x16x256xf32, #tpu.memory_space<vmem>>, %arg1: memref<1x512xf32, #tpu.memory_space<vmem>>, %arg2: memref<1x512xf32, #tpu.memory_space<vmem>>, %arg3: memref<8x16xf32, #tpu.memory_space<vmem>>, %arg4: memref<8x24xf32, #tpu.memory_space<vmem>>, %arg5: memref<16x8xf32, #tpu.memory_space<vmem>>, %arg6: memref<8x1xf32, #tpu.memory_space<vmem>>, %arg7: memref<8x1xf32, #tpu.memory_space<vmem>>, %arg8: memref<8x1xf32, #tpu.memory_space<vmem>>, %arg9: memref<8x1xf32, #tpu.memory_space<vmem>>, %arg10: memref<16x1xf32, #tpu.memory_space<vmem>>, %arg11: memref<16x1xf32, #tpu.memory_space<vmem>>, %arg12: memref<2x16x256xf32, #tpu.memory_space<vmem>>) attributes {dimension_semantics = [], scalar_prefetch = 0 : i64, scratch_operands = 0 : i64, tpu.core_type = #tpu.core_type<tc>} {
    %c0 = arith.constant 0 : index
    %c0_0 = arith.constant 0 : index
    %c0_1 = arith.constant 0 : index
    %0 = vector.load %arg0[%c0, %c0_0, %c0_1] : memref<2x16x256xf32, #tpu.memory_space<vmem>>, vector<1x16x256xf32>
    %1 = vector.shape_cast %0 : vector<1x16x256xf32> to vector<16x256xf32>
    %c1 = arith.constant 1 : index
    %c0_2 = arith.constant 0 : index
    %c0_3 = arith.constant 0 : index
    %2 = vector.load %arg0[%c1, %c0_2, %c0_3] : memref<2x16x256xf32, #tpu.memory_space<vmem>>, vector<1x16x256xf32>
    %3 = vector.shape_cast %2 : vector<1x16x256xf32> to vector<16x256xf32>
    %4 = tpu.concatenate %1, %3 in 1 : vector<16x256xf32>, vector<16x256xf32> -> vector<16x512xf32>
    %c0_4 = arith.constant 0 : index
    %c0_5 = arith.constant 0 : index
    %5 = vector.load %arg1[%c0_4, %c0_5] : memref<1x512xf32, #tpu.memory_space<vmem>>, vector<1x512xf32>
    %c0_6 = arith.constant 0 : index
    %c0_7 = arith.constant 0 : index
    %6 = vector.load %arg2[%c0_6, %c0_7] : memref<1x512xf32, #tpu.memory_space<vmem>>, vector<1x512xf32>
    %c0_8 = arith.constant 0 : index
    %c0_9 = arith.constant 0 : index
    %7 = vector.load %arg3[%c0_8, %c0_9] : memref<8x16xf32, #tpu.memory_space<vmem>>, vector<8x16xf32>
    %c0_10 = arith.constant 0 : index
    %c0_11 = arith.constant 0 : index
    %8 = vector.load %arg4[%c0_10, %c0_11] : memref<8x24xf32, #tpu.memory_space<vmem>>, vector<8x24xf32>
    %c0_12 = arith.constant 0 : index
    %c0_13 = arith.constant 0 : index
    %9 = vector.load %arg5[%c0_12, %c0_13] : memref<16x8xf32, #tpu.memory_space<vmem>>, vector<16x8xf32>
    %cst = arith.constant dense<0.000000e+00> : vector<8x512xf32>
    %10 = tpu.matmul %7, %4, %cst {dimension_numbers = #tpu.dot_dimension_numbers<[1], [0], [0], [1], [0, 0, 1, 1], [], []>} : vector<8x16xf32>, vector<16x512xf32>, vector<8x512xf32> -> vector<8x512xf32>
    %c0_14 = arith.constant 0 : index
    %c0_15 = arith.constant 0 : index
    %11 = vector.load %arg6[%c0_14, %c0_15] : memref<8x1xf32, #tpu.memory_space<vmem>>, vector<8x1xf32>
    %c0_16 = arith.constant 0 : index
    %c0_17 = arith.constant 0 : index
    %12 = vector.load %arg7[%c0_16, %c0_17] : memref<8x1xf32, #tpu.memory_space<vmem>>, vector<8x1xf32>
    %cst_18 = arith.constant dense<0.000000e+00> : vector<8xf32>
    %13 = vector.multi_reduction <add>, %10, %cst_18 [1] : vector<8x512xf32> to vector<8xf32>
    %14 = vector.shape_cast %13 : vector<8xf32> to vector<8x1xf32>
    %15 = arith.mulf %10, %10 : vector<8x512xf32>
    %cst_19 = arith.constant dense<0.000000e+00> : vector<8xf32>
    %16 = vector.multi_reduction <add>, %15, %cst_19 [1] : vector<8x512xf32> to vector<8xf32>
    %17 = vector.shape_cast %16 : vector<8xf32> to vector<8x1xf32>
    %cst_20 = arith.constant 0.001953125 : f32
    %18 = vector.broadcast %cst_20 : f32 to vector<8x1xf32>
    %19 = arith.mulf %14, %18 : vector<8x1xf32>
    %cst_21 = arith.constant 0.001953125 : f32
    %20 = vector.broadcast %cst_21 : f32 to vector<8x1xf32>
    %21 = arith.mulf %17, %20 : vector<8x1xf32>
    %22 = arith.mulf %19, %19 : vector<8x1xf32>
    %23 = arith.subf %21, %22 : vector<8x1xf32>
    %cst_22 = arith.constant 0.000000e+00 : f32
    %24 = vector.broadcast %cst_22 : f32 to vector<8x1xf32>
    %25 = arith.maximumf %23, %24 : vector<8x1xf32>
    %cst_23 = arith.constant 9.99999974E-6 : f32
    %26 = vector.broadcast %cst_23 : f32 to vector<8x1xf32>
    %27 = arith.addf %25, %26 : vector<8x1xf32>
    %28 = math.rsqrt %27 : vector<8x1xf32>
    %29 = arith.mulf %11, %28 : vector<8x1xf32>
    %30 = arith.mulf %19, %29 : vector<8x1xf32>
    %31 = arith.subf %12, %30 : vector<8x1xf32>
    %32 = vector.broadcast %29 : vector<8x1xf32> to vector<8x512xf32>
    %33 = arith.mulf %10, %32 : vector<8x512xf32>
    %34 = vector.broadcast %31 : vector<8x1xf32> to vector<8x512xf32>
    %35 = arith.addf %33, %34 : vector<8x512xf32>
    %cst_24 = arith.constant 0.000000e+00 : f32
    %36 = vector.broadcast %cst_24 : f32 to vector<8x512xf32>
    %37 = arith.maximumf %35, %36 : vector<8x512xf32>
    %c1_i32 = arith.constant 1 : i32
    %38 = tpu.dynamic_rotate %37 by %c1_i32 dim 1 : vector<8x512xf32>, i32 -> vector<8x512xf32>
    %39 = vector.broadcast %5 : vector<1x512xf32> to vector<8x512xf32>
    %40 = arith.mulf %38, %39 : vector<8x512xf32>
    %c511_i32 = arith.constant 511 : i32
    %41 = tpu.dynamic_rotate %37 by %c511_i32 dim 1 : vector<8x512xf32>, i32 -> vector<8x512xf32>
    %42 = vector.broadcast %6 : vector<1x512xf32> to vector<8x512xf32>
    %43 = arith.mulf %41, %42 : vector<8x512xf32>
    %44 = tpu.concatenate %40, %37, %43 in 0 : vector<8x512xf32>, vector<8x512xf32>, vector<8x512xf32> -> vector<24x512xf32>
    %cst_25 = arith.constant dense<0.000000e+00> : vector<8x512xf32>
    %45 = tpu.matmul %8, %44, %cst_25 {dimension_numbers = #tpu.dot_dimension_numbers<[1], [0], [0], [1], [0, 0, 1, 1], [], []>} : vector<8x24xf32>, vector<24x512xf32>, vector<8x512xf32> -> vector<8x512xf32>
    %c0_26 = arith.constant 0 : index
    %c0_27 = arith.constant 0 : index
    %46 = vector.load %arg8[%c0_26, %c0_27] : memref<8x1xf32, #tpu.memory_space<vmem>>, vector<8x1xf32>
    %c0_28 = arith.constant 0 : index
    %c0_29 = arith.constant 0 : index
    %47 = vector.load %arg9[%c0_28, %c0_29] : memref<8x1xf32, #tpu.memory_space<vmem>>, vector<8x1xf32>
    %cst_30 = arith.constant dense<0.000000e+00> : vector<8xf32>
    %48 = vector.multi_reduction <add>, %45, %cst_30 [1] : vector<8x512xf32> to vector<8xf32>
    %49 = vector.shape_cast %48 : vector<8xf32> to vector<8x1xf32>
    %50 = arith.mulf %45, %45 : vector<8x512xf32>
    %cst_31 = arith.constant dense<0.000000e+00> : vector<8xf32>
    %51 = vector.multi_reduction <add>, %50, %cst_31 [1] : vector<8x512xf32> to vector<8xf32>
    %52 = vector.shape_cast %51 : vector<8xf32> to vector<8x1xf32>
    %cst_32 = arith.constant 0.001953125 : f32
    %53 = vector.broadcast %cst_32 : f32 to vector<8x1xf32>
    %54 = arith.mulf %49, %53 : vector<8x1xf32>
    %cst_33 = arith.constant 0.001953125 : f32
    %55 = vector.broadcast %cst_33 : f32 to vector<8x1xf32>
    %56 = arith.mulf %52, %55 : vector<8x1xf32>
    %57 = arith.mulf %54, %54 : vector<8x1xf32>
    %58 = arith.subf %56, %57 : vector<8x1xf32>
    %cst_34 = arith.constant 0.000000e+00 : f32
    %59 = vector.broadcast %cst_34 : f32 to vector<8x1xf32>
    %60 = arith.maximumf %58, %59 : vector<8x1xf32>
    %cst_35 = arith.constant 9.99999974E-6 : f32
    %61 = vector.broadcast %cst_35 : f32 to vector<8x1xf32>
    %62 = arith.addf %60, %61 : vector<8x1xf32>
    %63 = math.rsqrt %62 : vector<8x1xf32>
    %64 = arith.mulf %46, %63 : vector<8x1xf32>
    %65 = arith.mulf %54, %64 : vector<8x1xf32>
    %66 = arith.subf %47, %65 : vector<8x1xf32>
    %67 = vector.broadcast %64 : vector<8x1xf32> to vector<8x512xf32>
    %68 = arith.mulf %45, %67 : vector<8x512xf32>
    %69 = vector.broadcast %66 : vector<8x1xf32> to vector<8x512xf32>
    %70 = arith.addf %68, %69 : vector<8x512xf32>
    %cst_36 = arith.constant 0.000000e+00 : f32
    %71 = vector.broadcast %cst_36 : f32 to vector<8x512xf32>
    %72 = arith.maximumf %70, %71 : vector<8x512xf32>
    %cst_37 = arith.constant dense<0.000000e+00> : vector<16x512xf32>
    %73 = tpu.matmul %9, %72, %cst_37 {dimension_numbers = #tpu.dot_dimension_numbers<[1], [0], [0], [1], [0, 0, 1, 1], [], []>} : vector<16x8xf32>, vector<8x512xf32>, vector<16x512xf32> -> vector<16x512xf32>
    %c0_38 = arith.constant 0 : index
    %c0_39 = arith.constant 0 : index
    %74 = vector.load %arg10[%c0_38, %c0_39] : memref<16x1xf32, #tpu.memory_space<vmem>>, vector<16x1xf32>
    %c0_40 = arith.constant 0 : index
    %c0_41 = arith.constant 0 : index
    %75 = vector.load %arg11[%c0_40, %c0_41] : memref<16x1xf32, #tpu.memory_space<vmem>>, vector<16x1xf32>
    %cst_42 = arith.constant dense<0.000000e+00> : vector<16xf32>
    %76 = vector.multi_reduction <add>, %73, %cst_42 [1] : vector<16x512xf32> to vector<16xf32>
    %77 = vector.shape_cast %76 : vector<16xf32> to vector<16x1xf32>
    %78 = arith.mulf %73, %73 : vector<16x512xf32>
    %cst_43 = arith.constant dense<0.000000e+00> : vector<16xf32>
    %79 = vector.multi_reduction <add>, %78, %cst_43 [1] : vector<16x512xf32> to vector<16xf32>
    %80 = vector.shape_cast %79 : vector<16xf32> to vector<16x1xf32>
    %cst_44 = arith.constant 0.001953125 : f32
    %81 = vector.broadcast %cst_44 : f32 to vector<16x1xf32>
    %82 = arith.mulf %77, %81 : vector<16x1xf32>
    %cst_45 = arith.constant 0.001953125 : f32
    %83 = vector.broadcast %cst_45 : f32 to vector<16x1xf32>
    %84 = arith.mulf %80, %83 : vector<16x1xf32>
    %85 = arith.mulf %82, %82 : vector<16x1xf32>
    %86 = arith.subf %84, %85 : vector<16x1xf32>
    %cst_46 = arith.constant 0.000000e+00 : f32
    %87 = vector.broadcast %cst_46 : f32 to vector<16x1xf32>
    %88 = arith.maximumf %86, %87 : vector<16x1xf32>
    %cst_47 = arith.constant 9.99999974E-6 : f32
    %89 = vector.broadcast %cst_47 : f32 to vector<16x1xf32>
    %90 = arith.addf %88, %89 : vector<16x1xf32>
    %91 = math.rsqrt %90 : vector<16x1xf32>
    %92 = arith.mulf %74, %91 : vector<16x1xf32>
    %93 = arith.mulf %82, %92 : vector<16x1xf32>
    %94 = arith.subf %75, %93 : vector<16x1xf32>
    %95 = vector.broadcast %92 : vector<16x1xf32> to vector<16x512xf32>
    %96 = arith.mulf %73, %95 : vector<16x512xf32>
    %97 = vector.broadcast %94 : vector<16x1xf32> to vector<16x512xf32>
    %98 = arith.addf %96, %97 : vector<16x512xf32>
    %c0_48 = arith.constant 0 : index
    %c0_49 = arith.constant 0 : index
    %c0_50 = arith.constant 0 : index
    %99 = vector.load %arg0[%c0_48, %c0_49, %c0_50] : memref<2x16x256xf32, #tpu.memory_space<vmem>>, vector<1x16x256xf32>
    %100 = vector.shape_cast %99 : vector<1x16x256xf32> to vector<16x256xf32>
    %101 = vector.extract_strided_slice %98 {offsets = [0, 0], sizes = [16, 256], strides = [1, 1]} : vector<16x512xf32> to vector<16x256xf32>
    %102 = arith.addf %100, %101 : vector<16x256xf32>
    %c0_51 = arith.constant 0 : index
    %c0_52 = arith.constant 0 : index
    %c0_53 = arith.constant 0 : index
    %103 = vector.load %arg12[%c0_51, %c0_52, %c0_53] : memref<2x16x256xf32, #tpu.memory_space<vmem>>, vector<1x16x256xf32>
    %104 = vector.shape_cast %103 : vector<1x16x256xf32> to vector<16x256xf32>
    %105 = vector.shape_cast %102 : vector<16x256xf32> to vector<1x16x256xf32>
    tpu.vector_store %arg12[%c0_51, %c0_52, %c0_53], %105 {strides = array<i32>} : memref<2x16x256xf32, #tpu.memory_space<vmem>>, vector<1x16x256xf32>,
    %c1_54 = arith.constant 1 : index
    %c0_55 = arith.constant 0 : index
    %c0_56 = arith.constant 0 : index
    %106 = vector.load %arg0[%c1_54, %c0_55, %c0_56] : memref<2x16x256xf32, #tpu.memory_space<vmem>>, vector<1x16x256xf32>
    %107 = vector.shape_cast %106 : vector<1x16x256xf32> to vector<16x256xf32>
    %108 = vector.extract_strided_slice %98 {offsets = [0, 256], sizes = [16, 256], strides = [1, 1]} : vector<16x512xf32> to vector<16x256xf32>
    %109 = arith.addf %107, %108 : vector<16x256xf32>
    %c1_57 = arith.constant 1 : index
    %c0_58 = arith.constant 0 : index
    %c0_59 = arith.constant 0 : index
    %110 = vector.load %arg12[%c1_57, %c0_58, %c0_59] : memref<2x16x256xf32, #tpu.memory_space<vmem>>, vector<1x16x256xf32>
    %111 = vector.shape_cast %110 : vector<1x16x256xf32> to vector<16x256xf32>
    %112 = vector.shape_cast %109 : vector<16x256xf32> to vector<1x16x256xf32>
    tpu.vector_store %arg12[%c1_57, %c0_58, %c0_59], %112 {strides = array<i32>} : memref<2x16x256xf32, #tpu.memory_space<vmem>>, vector<1x16x256xf32>,
    return
  }
}

</mosaic_0001>

<llo_original>
// kernel: residual_bottleneck_pallas.1
$region0: #{residual_bottleneck_pallas.1}
  #allocation0 [shape = 'u32[]', space=smem, size = 0x4, offset = 0x4, fixed_abs, tag = 'smem constant byte address 0x4 - core index']
  #allocation1 [shape = 'u32[144,128]{1,0:T(1,128)}', space=vmem, size = 0x12000, scoped, tag = 'internal scratch']
  %s0 = inlined_call_operand.vmem [shape: f32[2,16,256], index: 0, kind: input, shape index: {}]
  %s1 = inlined_call_operand.vmem [shape: f32[1,512], index: 1, kind: input, shape index: {}]
  %s2 = inlined_call_operand.vmem [shape: f32[1,512], index: 2, kind: input, shape index: {}]
  %s3 = inlined_call_operand.vmem [shape: f32[8,16], index: 3, kind: input, shape index: {}]
  %s4 = inlined_call_operand.vmem [shape: f32[8,24], index: 4, kind: input, shape index: {}]
  %s5 = inlined_call_operand.vmem [shape: f32[16,8], index: 5, kind: input, shape index: {}]
  %s6 = inlined_call_operand.vmem [shape: f32[8,1], index: 6, kind: input, shape index: {}]
  %s7 = inlined_call_operand.vmem [shape: f32[8,1], index: 7, kind: input, shape index: {}]
  %s8 = inlined_call_operand.vmem [shape: f32[8,1], index: 8, kind: input, shape index: {}]
  %s9 = inlined_call_operand.vmem [shape: f32[8,1], index: 9, kind: input, shape index: {}]
  %s10 = inlined_call_operand.vmem [shape: f32[16,1], index: 10, kind: input, shape index: {}]
  %s11 = inlined_call_operand.vmem [shape: f32[16,1], index: 11, kind: input, shape index: {}]
  %s12 = inlined_call_operand.hbm [shape: f32[2,16,256], index: 12, kind: output, shape index: {}]
  %s13 = sld [smem:[#allocation0]]
  $region58: #{residual_bottleneck_pallas.1} parent=0
    _
  %s15 = ssub.s32 1, %s13
  %s16 = scalar_select 0, %s15, %s13
  $region1: #{residual_bottleneck_pallas.1} parent=0
    #allocation2 [shape = 'u8[32768]{0}', space=vmem, size = 0x8000, scoped, tag = 'output window, operand 0, single buffered']
    #allocation3 [shape = 's32[1]{0}', space=sflag, size = 0x4, scoped, tag = 'scoped memory for residual_bottleneck_pallas.1']
    %17 = vsyncpa [#allocation3], 0
    // Predicated region
    $region2: #{residual_bottleneck_pallas.1} parent=1 // pred_check
      _
    $region3: #{residual_bottleneck_pallas.1} parent=1 // pred_check_branch
      %19 = sbr.rel (0) target = $region5
    $region4: #{residual_bottleneck_pallas.1} parent=1 // pred_region
      _
    $region5: #{residual_bottleneck_pallas.1} parent=1 // pred_fallthru
      _
    // Predicated region
    $region6: #{residual_bottleneck_pallas.1} parent=1 // pred_check
      _
    $region7: #{residual_bottleneck_pallas.1} parent=1 // pred_check_branch
      %21 = sbr.rel (0) target = $region9
    $region8: #{residual_bottleneck_pallas.1} parent=1 // pred_region
      _
    $region9: #{residual_bottleneck_pallas.1} parent=1 // pred_fallthru
      _
    // Predicated region
    $region10: #{residual_bottleneck_pallas.1} parent=1 // pred_check
      _
    $region11: #{residual_bottleneck_pallas.1} parent=1 // pred_check_branch
      %23 = sbr.rel (0) target = $region13
    $region12: #{residual_bottleneck_pallas.1} parent=1 // pred_region
      _
    $region13: #{residual_bottleneck_pallas.1} parent=1 // pred_fallthru
      _
    // Predicated region
    $region14: #{residual_bottleneck_pallas.1} parent=1 // pred_check
      _
    $region15: #{residual_bottleneck_pallas.1} parent=1 // pred_check_branch
      %25 = sbr.rel (0) target = $region17
    $region16: #{residual_bottleneck_pallas.1} parent=1 // pred_region
      _
    $region17: #{residual_bottleneck_pallas.1} parent=1 // pred_fallthru
      _
    // Predicated region
    $region18: #{residual_bottleneck_pallas.1} parent=1 // pred_check
      _
    $region19: #{residual_bottleneck_pallas.1} parent=1 // pred_check_branch
      %27 = sbr.rel (0) target = $region21
    $region20: #{residual_bottleneck_pallas.1} parent=1 // pred_region
      _
    $region21: #{residual_bottleneck_pallas.1} parent=1 // pred_fallthru
      _
    // Predicated region
    $region22: #{residual_bottleneck_pallas.1} parent=1 // pred_check
      _
    $region23: #{residual_bottleneck_pallas.1} parent=1 // pred_check_branch
      %29 = sbr.rel (0) target = $region25
    $region24: #{residual_bottleneck_pallas.1} parent=1 // pred_region
      _
    $region25: #{residual_bottleneck_pallas.1} parent=1 // pred_fallthru
      _
    // Predicated region
    $region26: #{residual_bottleneck_pallas.1} parent=1 // pred_check
      _
    $region27: #{residual_bottleneck_pallas.1} parent=1 // pred_check_branch
      %31 = sbr.rel (0) target = $region29
    $region28: #{residual_bottleneck_pallas.1} parent=1 // pred_region
      _
    $region29: #{residual_bottleneck_pallas.1} parent=1 // pred_fallthru
      _
    // Predicated region
    $region30: #{residual_bottleneck_pallas.1} parent=1 // pred_check
      _
    $region31: #{residual_bottleneck_pallas.1} parent=1 // pred_check_branch
      %33 = sbr.rel (0) target = $region33
    $region32: #{residual_bottleneck_pallas.1} parent=1 // pred_region
      _
    $region33: #{residual_bottleneck_pallas.1} parent=1 // pred_fallthru
      _
    // Predicated region
    $region34: #{residual_bottleneck_pallas.1} parent=1 // pred_check
      _
    $region35: #{residual_bottleneck_pallas.1} parent=1 // pred_check_branch
      %35 = sbr.rel (0) target = $region37
    $region36: #{residual_bottleneck_pallas.1} parent=1 // pred_region
      _
    $region37: #{residual_bottleneck_pallas.1} parent=1 // pred_fallthru
      _
    // Predicated region
    $region38: #{residual_bottleneck_pallas.1} parent=1 // pred_check
      _
    $region39: #{residual_bottleneck_pallas.1} parent=1 // pred_check_branch
      %37 = sbr.rel (0) target = $region41
    $region40: #{residual_bottleneck_pallas.1} parent=1 // pred_region
      _
    $region41: #{residual_bottleneck_pallas.1} parent=1 // pred_fallthru
      _
    // Predicated region
    $region42: #{residual_bottleneck_pallas.1} parent=1 // pred_check
      _
    $region43: #{residual_bottleneck_pallas.1} parent=1 // pred_check_branch
      %39 = sbr.rel (0) target = $region45
    $region44: #{residual_bottleneck_pallas.1} parent=1 // pred_region
      _
    $region45: #{residual_bottleneck_pallas.1} parent=1 // pred_fallthru
      _
    // Predicated region
    $region46: #{residual_bottleneck_pallas.1} parent=1 // pred_check
      _
    $region47: #{residual_bottleneck_pallas.1} parent=1 // pred_check_branch
      %41 = sbr.rel (0) target = $region49
    $region48: #{residual_bottleneck_pallas.1} parent=1 // pred_region
      _
    $region49: #{residual_bottleneck_pallas.1} parent=1 // pred_fallthru
      _
    %v42 = vld [vmem:[%s0] sm:$0xff]
    %v43 = vld [vmem:[%s0 + $0x8] sm:$0xff]
    %v44 = vld [vmem:[%s0 + $0x10] sm:$0xff]
    %v45 = vld [vmem:[%s0 + $0x18] sm:$0xff]
    %s46 = scalar_lea.vmem %s0, 32
    %v47 = vld [vmem:[%s46] sm:$0xff]
    %v48 = vld [vmem:[%s46 + $0x8] sm:$0xff]
    %v49 = vld [vmem:[%s46 + $0x10] sm:$0xff]
    %v50 = vld [vmem:[%s46 + $0x18] sm:$0xff]
    %v51 = vld [vmem:[%s1] sm:$0xf]
    %v52 = vld [vmem:[%s2] sm:$0xf]
    %v53 = vld [vmem:[%s3] sm:$0xff]
    %v54 = vld [vmem:[%s4] sm:$0xff]
    %v55 = vld [vmem:[%s5] sm:$0xff]
    %v56 = vld [vmem:[%s5 + $0x8] sm:$0xff]
    %vm57 = vcmask 130048
    %v59 = vsel %vm57, %v53, 0
    %61 = vmatprep.subr.mxu0 %v43
    %62 = vmatpush1.msra.mxu0 %v42
    %63 = vmatprep.subr.mxu0 %v45
    %64 = vmatpush1.msra.mxu0 %v44
    %65 = vmatprep.subr.mxu0 0.0
    %66 = vmatpush1.msra.mxu0 0.0
    %67 = vmatprep.subr.mxu0 0.0
    %68 = vmatpush1.msra.mxu0 0.0
    %69 = vmatprep.subr.mxu0 0.0
    %70 = vmatpush1.msra.mxu0 0.0
    %71 = vmatprep.subr.mxu0 0.0
    %72 = vmatpush1.msra.mxu0 0.0
    %73 = vmatprep.subr.mxu0 0.0
    %74 = vmatpush1.msra.mxu0 0.0
    %75 = vmatprep.subr.mxu0 0.0
    %76 = vmatpush1.msra.mxu0 0.0
    %77 = vmatprep.subr.mxu0 0.0
    %78 = vmatpush1.msra.mxu0 0.0
    %79 = vmatprep.subr.mxu0 0.0
    %80 = vmatpush1.msra.mxu0 0.0
    %81 = vmatprep.subr.mxu0 0.0
    %82 = vmatpush1.msra.mxu0 0.0
    %83 = vmatprep.subr.mxu0 0.0
    %84 = vmatpush1.msra.mxu0 0.0
    %85 = vmatprep.subr.mxu0 0.0
    %86 = vmatpush1.msra.mxu0 0.0
    %87 = vmatprep.subr.mxu0 0.0
    %88 = vmatpush1.msra.mxu0 0.0
    %89 = vmatprep.subr.mxu0 0.0
    %90 = vmatpush1.msra.mxu0 0.0
    %91 = vmatprep.subr.mxu0 0.0
    %92 = vmatpush1.msra.mxu0 0.0
    %93 = vmatprep.subr.mxu0 0.0
    %94 = vmatpush1.msra.mxu0 0.0
    %95 = vmatprep.subr.mxu0 0.0
    %96 = vmatpush1.msra.mxu0 0.0
    %97 = vmatprep.subr.mxu0 0.0
    %98 = vmatpush1.msra.mxu0 0.0
    %99 = vmatprep.subr.mxu0 0.0
    %100 = vmatpush1.msra.mxu0 0.0
    %101 = vmatprep.subr.mxu0 0.0
    %102 = vmatpush1.msra.mxu0 0.0
    %103 = vmatprep.subr.mxu0 0.0
    %104 = vmatpush1.msra.mxu0 0.0
    %105 = vmatprep.subr.mxu0 0.0
    %106 = vmatpush1.msra.mxu0 0.0
    %107 = vmatprep.subr.mxu0 0.0
    %108 = vmatpush1.msra.mxu0 0.0
    %109 = vmatprep.subr.mxu0 0.0
    %110 = vmatpush1.msra.mxu0 0.0
    %111 = vmatprep.subr.mxu0 0.0
    %112 = vmatpush1.msra.mxu0 0.0
    %113 = vmatprep.subr.mxu0 0.0
    %114 = vmatpush1.msra.mxu0 0.0
    %115 = vmatprep.subr.mxu0 0.0
    %116 = vmatpush1.msra.mxu0 0.0
    %117 = vmatprep.subr.mxu0 0.0
    %118 = vmatpush1.msra.mxu0 0.0
    %119 = vmatprep.subr.mxu0 0.0
    %120 = vmatpush1.msra.mxu0 0.0
    %121 = vmatprep.subr.mxu0 0.0
    %122 = vmatpush1.msra.mxu0 0.0
    %123 = vmatprep.subr.mxu0 0.0
    %124 = vmatpush1.msra.mxu0 0.0
    %125 = vmatprep.mubr.f32.mxu0 0.0
    %126 = vmatmul.mubr.f32.gmra.mrb[0].mxu0 %v59
    %v127 = vpop.f32.mrb[0].mxu0
    %v128 = vadd.f32 0.0, %v127
    %v129 = vpop.f32.mrb[0].mxu0
    %v130 = vadd.f32 0.0, %v129
    %131 = vdwg.mxu0
    %132 = vmatprep.subr.mxu0 %v48
    %133 = vmatpush1.msra.mxu0 %v47
    %134 = vmatprep.subr.mxu0 %v50
    %135 = vmatpush1.msra.mxu0 %v49
    %136 = vmatprep.subr.mxu0 0.0
    %137 = vmatpush1.msra.mxu0 0.0
    %138 = vmatprep.subr.mxu0 0.0
    %139 = vmatpush1.msra.mxu0 0.0
    %140 = vmatprep.subr.mxu0 0.0
    %141 = vmatpush1.msra.mxu0 0.0
    %142 = vmatprep.subr.mxu0 0.0
    %143 = vmatpush1.msra.mxu0 0.0
    %144 = vmatprep.subr.mxu0 0.0
    %145 = vmatpush1.msra.mxu0 0.0
    %146 = vmatprep.subr.mxu0 0.0
    %147 = vmatpush1.msra.mxu0 0.0
    %148 = vmatprep.subr.mxu0 0.0
    %149 = vmatpush1.msra.mxu0 0.0
    %150 = vmatprep.subr.mxu0 0.0
    %151 = vmatpush1.msra.mxu0 0.0
    %152 = vmatprep.subr.mxu0 0.0
    %153 = vmatpush1.msra.mxu0 0.0
    %154 = vmatprep.subr.mxu0 0.0
    %155 = vmatpush1.msra.mxu0 0.0
    %156 = vmatprep.subr.mxu0 0.0
    %157 = vmatpush1.msra.mxu0 0.0
    %158 = vmatprep.subr.mxu0 0.0
    %159 = vmatpush1.msra.mxu0 0.0
    %160 = vmatprep.subr.mxu0 0.0
    %161 = vmatpush1.msra.mxu0 0.0
    %162 = vmatprep.subr.mxu0 0.0
    %163 = vmatpush1.msra.mxu0 0.0
    %164 = vmatprep.subr.mxu0 0.0
    %165 = vmatpush1.msra.mxu0 0.0
    %166 = vmatprep.subr.mxu0 0.0
    %167 = vmatpush1.msra.mxu0 0.0
    %168 = vmatprep.subr.mxu0 0.0
    %169 = vmatpush1.msra.mxu0 0.0
    %170 = vmatprep.subr.mxu0 0.0
    %171 = vmatpush1.msra.mxu0 0.0
    %172 = vmatprep.subr.mxu0 0.0
    %173 = vmatpush1.msra.mxu0 0.0
    %174 = vmatprep.subr.mxu0 0.0
    %175 = vmatpush1.msra.mxu0 0.0
    %176 = vmatprep.subr.mxu0 0.0
    %177 = vmatpush1.msra.mxu0 0.0
    %178 = vmatprep.subr.mxu0 0.0
    %179 = vmatpush1.msra.mxu0 0.0
    %180 = vmatprep.subr.mxu0 0.0
    %181 = vmatpush1.msra.mxu0 0.0
    %182 = vmatprep.subr.mxu0 0.0
    %183 = vmatpush1.msra.mxu0 0.0
    %184 = vmatprep.subr.mxu0 0.0
    %185 = vmatpush1.msra.mxu0 0.0
    %186 = vmatprep.subr.mxu0 0.0
    %187 = vmatpush1.msra.mxu0 0.0
    %188 = vmatprep.subr.mxu0 0.0
    %189 = vmatpush1.msra.mxu0 0.0
    %190 = vmatprep.subr.mxu0 0.0
    %191 = vmatpush1.msra.mxu0 0.0
    %192 = vmatprep.subr.mxu0 0.0
    %193 = vmatpush1.msra.mxu0 0.0
    %194 = vmatprep.subr.mxu0 0.0
    %195 = vmatpush1.msra.mxu0 0.0
    %196 = vmatprep.mubr.f32.mxu0 0.0
    %197 = vmatmul.mubr.f32.gmra.mrb[0].mxu0 %v59
    %v198 = vpop.f32.mrb[0].mxu0
    %v199 = vadd.f32 0.0, %v198
    %v200 = vpop.f32.mrb[0].mxu0
    %v201 = vadd.f32 0.0, %v200
    %202 = vdwg.mxu0
    %v203 = vld [vmem:[%s6] sm:$0xff]
    %v204 = vld [vmem:[%s7] sm:$0xff]
    %v205 = vadd.f32 %v128, %v130
    %v206 = vadd.f32 %v205, %v199
    %v207 = vadd.f32 %v206, %v201
    %208 = vadd.xlane.f32.xlu0 %v207
    %v209 = vpop.xlane.xlu0 %208
    %v210 = vmul.f32 %v128, %v128
    %v211 = vmul.f32 %v130, %v130
    %v212 = vmul.f32 %v199, %v199
    %v213 = vmul.f32 %v201, %v201
    %v214 = vadd.f32 %v210, %v211
    %v215 = vadd.f32 %v214, %v212
    %v216 = vadd.f32 %v215, %v213
    %217 = vadd.xlane.f32.xlu0 %v216
    %v218 = vpop.xlane.xlu0 %217
    %v219 = vmul.f32 %v209, 0.001953125
    %v220 = vmul.f32 %v218, 0.001953125
    %v221 = vmul.f32 %v219, %v219
    %v222 = vsub.f32 %v220, %v221
    %v223 = vmax.f32 %v222, 0.0
    %v224 = vadd.f32 %v223, 1e-05
    %v225 = vrsqrt.pop %v224
    %v226 = vmul.f32 %v203, %v225
    %v227 = vmul.f32 %v219, %v226
    %v228 = vsub.f32 %v204, %v227
    %230 = vset.pattern.permute.xlu0 0
    %231 = vperm.xlu0 %230, %v226
    %v232 = vpop.permute.xlu0 %231
    %v234 = vmul.f32 %v128, %v232
    %v235 = vmul.f32 %v130, %v232
    %v236 = vmul.f32 %v199, %v232
    %v237 = vmul.f32 %v201, %v232
    %239 = vset.pattern.permute.xlu0 0
    %240 = vperm.xlu0 %239, %v228
    %v241 = vpop.permute.xlu0 %240
    %v243 = vadd.f32 %v234, %v241
    %v244 = vadd.f32 %v235, %v241
    %v245 = vadd.f32 %v236, %v241
    %v246 = vadd.f32 %v237, %v241
    %v247 = vmax.f32 %v243, 0.0
    %v248 = vmax.f32 %v244, 0.0
    %v249 = vmax.f32 %v245, 0.0
    %v250 = vmax.f32 %v246, 0.0
    %251 = vrot.lane.b32.xlu0 %v247, 1
    %v252 = vpop.permute.xlu0 %251
    %253 = vrot.lane.b32.xlu0 %v248, 1
    %v254 = vpop.permute.xlu0 %253
    %255 = vrot.lane.b32.xlu0 %v249, 1
    %v256 = vpop.permute.xlu0 %255
    %257 = vrot.lane.b32.xlu0 %v250, 1
    %v258 = vpop.permute.xlu0 %257
    %v259 = vlaneseq
    %v260 = vand.u32 %v259, 127
    %vm261 = vcmp.lt.s32.totalorder %v260, 1
    %v262 = vsel %vm261, %v256, %v258
    %v263 = vsel %vm261, %v254, %v256
    %v264 = vsel %vm261, %v252, %v254
    %v265 = vsel %vm261, %v258, %v252
    %v267 = vlaneseq
    %v268 = vshrl.u32 %v267, 7
    %v269 = vsub.s32 0, %v268
    %v270 = vrot.slane %v51, %v269
    %v271 = vlaneseq
    %v272 = vshrl.u32 %v271, 7
    %v273 = vsub.s32 1, %v272
    %v274 = vrot.slane %v51, %v273
    %v275 = vlaneseq
    %v276 = vshrl.u32 %v275, 7
    %v277 = vsub.s32 2, %v276
    %v278 = vrot.slane %v51, %v277
    %v279 = vlaneseq
    %v280 = vshrl.u32 %v279, 7
    %v281 = vsub.s32 3, %v280
    %v282 = vrot.slane %v51, %v281
    %v287 = vmul.f32 %v265, %v270
    %v288 = vmul.f32 %v264, %v274
    %v289 = vmul.f32 %v263, %v278
    %v290 = vmul.f32 %v262, %v282
    %291 = vrot.lane.b32.xlu0 %v247, 127
    %v292 = vpop.permute.xlu0 %291
    %293 = vrot.lane.b32.xlu0 %v248, 127
    %v294 = vpop.permute.xlu0 %293
    %295 = vrot.lane.b32.xlu0 %v249, 127
    %v296 = vpop.permute.xlu0 %295
    %297 = vrot.lane.b32.xlu0 %v250, 127
    %v298 = vpop.permute.xlu0 %297
    %vm299 = vcmp.lt.s32.totalorder %v260, 127
    %v300 = vsel %vm299, %v296, %v298
    %v301 = vsel %vm299, %v294, %v296
    %v302 = vsel %vm299, %v292, %v294
    %v303 = vsel %vm299, %v298, %v292
    %v305 = vlaneseq
    %v306 = vshrl.u32 %v305, 7
    %v307 = vsub.s32 0, %v306
    %v308 = vrot.slane %v52, %v307
    %v309 = vlaneseq
    %v310 = vshrl.u32 %v309, 7
    %v311 = vsub.s32 1, %v310
    %v312 = vrot.slane %v52, %v311
    %v313 = vlaneseq
    %v314 = vshrl.u32 %v313, 7
    %v315 = vsub.s32 2, %v314
    %v316 = vrot.slane %v52, %v315
    %v317 = vlaneseq
    %v318 = vshrl.u32 %v317, 7
    %v319 = vsub.s32 3, %v318
    %v320 = vrot.slane %v52, %v319
    %v325 = vmul.f32 %v302, %v308
    %v326 = vmul.f32 %v301, %v312
    %v327 = vmul.f32 %v300, %v316
    %v328 = vmul.f32 %v303, %v320
    %vm329 = vcmask 195584
    %v331 = vsel %vm329, %v54, 0
    %333 = vmatprep.subr.mxu0 %v288
    %334 = vmatpush1.msra.mxu0 %v287
    %335 = vmatprep.subr.mxu0 %v248
    %336 = vmatpush1.msra.mxu0 %v247
    %337 = vmatprep.subr.mxu0 %v326
    %338 = vmatpush1.msra.mxu0 %v325
    %339 = vmatprep.subr.mxu0 0.0
    %340 = vmatpush1.msra.mxu0 0.0
    %341 = vmatprep.subr.mxu0 0.0
    %342 = vmatpush1.msra.mxu0 0.0
    %343 = vmatprep.subr.mxu0 0.0
    %344 = vmatpush1.msra.mxu0 0.0
    %345 = vmatprep.subr.mxu0 0.0
    %346 = vmatpush1.msra.mxu0 0.0
    %347 = vmatprep.subr.mxu0 0.0
    %348 = vmatpush1.msra.mxu0 0.0
    %349 = vmatprep.subr.mxu0 0.0
    %350 = vmatpush1.msra.mxu0 0.0
    %351 = vmatprep.subr.mxu0 0.0
    %352 = vmatpush1.msra.mxu0 0.0
    %353 = vmatprep.subr.mxu0 0.0
    %354 = vmatpush1.msra.mxu0 0.0
    %355 = vmatprep.subr.mxu0 0.0
    %356 = vmatpush1.msra.mxu0 0.0
    %357 = vmatprep.subr.mxu0 0.0
    %358 = vmatpush1.msra.mxu0 0.0
    %359 = vmatprep.subr.mxu0 0.0
    %360 = vmatpush1.msra.mxu0 0.0
    %361 = vmatprep.subr.mxu0 0.0
    %362 = vmatpush1.msra.mxu0 0.0
    %363 = vmatprep.subr.mxu0 0.0
    %364 = vmatpush1.msra.mxu0 0.0
    %365 = vmatprep.subr.mxu0 0.0
    %366 = vmatpush1.msra.mxu0 0.0
    %367 = vmatprep.subr.mxu0 0.0
    %368 = vmatpush1.msra.mxu0 0.0
    %369 = vmatprep.subr.mxu0 0.0
    %370 = vmatpush1.msra.mxu0 0.0
    %371 = vmatprep.subr.mxu0 0.0
    %372 = vmatpush1.msra.mxu0 0.0
    %373 = vmatprep.subr.mxu0 0.0
    %374 = vmatpush1.msra.mxu0 0.0
    %375 = vmatprep.subr.mxu0 0.0
    %376 = vmatpush1.msra.mxu0 0.0
    %377 = vmatprep.subr.mxu0 0.0
    %378 = vmatpush1.msra.mxu0 0.0
    %379 = vmatprep.subr.mxu0 0.0
    %380 = vmatpush1.msra.mxu0 0.0
    %381 = vmatprep.subr.mxu0 0.0
    %382 = vmatpush1.msra.mxu0 0.0
    %383 = vmatprep.subr.mxu0 0.0
    %384 = vmatpush1.msra.mxu0 0.0
    %385 = vmatprep.subr.mxu0 0.0
    %386 = vmatpush1.msra.mxu0 0.0
    %387 = vmatprep.subr.mxu0 0.0
    %388 = vmatpush1.msra.mxu0 0.0
    %389 = vmatprep.subr.mxu0 0.0
    %390 = vmatpush1.msra.mxu0 0.0
    %391 = vmatprep.subr.mxu0 0.0
    %392 = vmatpush1.msra.mxu0 0.0
    %393 = vmatprep.subr.mxu0 0.0
    %394 = vmatpush1.msra.mxu0 0.0
    %395 = vmatprep.subr.mxu0 0.0
    %396 = vmatpush1.msra.mxu0 0.0
    %397 = vmatprep.mubr.f32.mxu0 0.0
    %398 = vmatmul.mubr.f32.gmra.mrb[0].mxu0 %v331
    %v399 = vpop.f32.mrb[0].mxu0
    %v400 = vadd.f32 0.0, %v399
    %v401 = vpop.f32.mrb[0].mxu0
    %v402 = vadd.f32 0.0, %v401
    %403 = vdwg.mxu0
    %404 = vmatprep.subr.mxu0 %v290
    %405 = vmatpush1.msra.mxu0 %v289
    %406 = vmatprep.subr.mxu0 %v250
    %407 = vmatpush1.msra.mxu0 %v249
    %408 = vmatprep.subr.mxu0 %v328
    %409 = vmatpush1.msra.mxu0 %v327
    %410 = vmatprep.subr.mxu0 0.0
    %411 = vmatpush1.msra.mxu0 0.0
    %412 = vmatprep.subr.mxu0 0.0
    %413 = vmatpush1.msra.mxu0 0.0
    %414 = vmatprep.subr.mxu0 0.0
    %415 = vmatpush1.msra.mxu0 0.0
    %416 = vmatprep.subr.mxu0 0.0
    %417 = vmatpush1.msra.mxu0 0.0
    %418 = vmatprep.subr.mxu0 0.0
    %419 = vmatpush1.msra.mxu0 0.0
    %420 = vmatprep.subr.mxu0 0.0
    %421 = vmatpush1.msra.mxu0 0.0
    %422 = vmatprep.subr.mxu0 0.0
    %423 = vmatpush1.msra.mxu0 0.0
    %424 = vmatprep.subr.mxu0 0.0
    %425 = vmatpush1.msra.mxu0 0.0
    %426 = vmatprep.subr.mxu0 0.0
    %427 = vmatpush1.msra.mxu0 0.0
    %428 = vmatprep.subr.mxu0 0.0
    %429 = vmatpush1.msra.mxu0 0.0
    %430 = vmatprep.subr.mxu0 0.0
    %431 = vmatpush1.msra.mxu0 0.0
    %432 = vmatprep.subr.mxu0 0.0
    %433 = vmatpush1.msra.mxu0 0.0
    %434 = vmatprep.subr.mxu0 0.0
    %435 = vmatpush1.msra.mxu0 0.0
    %436 = vmatprep.subr.mxu0 0.0
    %437 = vmatpush1.msra.mxu0 0.0
    %438 = vmatprep.subr.mxu0 0.0
    %439 = vmatpush1.msra.mxu0 0.0
    %440 = vmatprep.subr.mxu0 0.0
    %441 = vmatpush1.msra.mxu0 0.0
    %442 = vmatprep.subr.mxu0 0.0
    %443 = vmatpush1.msra.mxu0 0.0
    %444 = vmatprep.subr.mxu0 0.0
    %445 = vmatpush1.msra.mxu0 0.0
    %446 = vmatprep.subr.mxu0 0.0
    %447 = vmatpush1.msra.mxu0 0.0
    %448 = vmatprep.subr.mxu0 0.0
    %449 = vmatpush1.msra.mxu0 0.0
    %450 = vmatprep.subr.mxu0 0.0
    %451 = vmatpush1.msra.mxu0 0.0
    %452 = vmatprep.subr.mxu0 0.0
    %453 = vmatpush1.msra.mxu0 0.0
    %454 = vmatprep.subr.mxu0 0.0
    %455 = vmatpush1.msra.mxu0 0.0
    %456 = vmatprep.subr.mxu0 0.0
    %457 = vmatpush1.msra.mxu0 0.0
    %458 = vmatprep.subr.mxu0 0.0
    %459 = vmatpush1.msra.mxu0 0.0
    %460 = vmatprep.subr.mxu0 0.0
    %461 = vmatpush1.msra.mxu0 0.0
    %462 = vmatprep.subr.mxu0 0.0
    %463 = vmatpush1.msra.mxu0 0.0
    %464 = vmatprep.subr.mxu0 0.0
    %465 = vmatpush1.msra.mxu0 0.0
    %466 = vmatprep.subr.mxu0 0.0
    %467 = vmatpush1.msra.mxu0 0.0
    %468 = vmatprep.mubr.f32.mxu0 0.0
    %469 = vmatmul.mubr.f32.gmra.mrb[0].mxu0 %v331
    %v470 = vpop.f32.mrb[0].mxu0
    %v471 = vadd.f32 0.0, %v470
    %v472 = vpop.f32.mrb[0].mxu0
    %v473 = vadd.f32 0.0, %v472
    %474 = vdwg.mxu0
    %v475 = vld [vmem:[%s8] sm:$0xff]
    %v476 = vld [vmem:[%s9] sm:$0xff]
    %v477 = vadd.f32 %v400, %v402
    %v478 = vadd.f32 %v477, %v471
    %v479 = vadd.f32 %v478, %v473
    %480 = vadd.xlane.f32.xlu0 %v479
    %v481 = vpop.xlane.xlu0 %480
    %v482 = vmul.f32 %v400, %v400
    %v483 = vmul.f32 %v402, %v402
    %v484 = vmul.f32 %v471, %v471
    %v485 = vmul.f32 %v473, %v473
    %v486 = vadd.f32 %v482, %v483
    %v487 = vadd.f32 %v486, %v484
    %v488 = vadd.f32 %v487, %v485
    %489 = vadd.xlane.f32.xlu0 %v488
    %v490 = vpop.xlane.xlu0 %489
    %v491 = vmul.f32 %v481, 0.001953125
    %v492 = vmul.f32 %v490, 0.001953125
    %v493 = vmul.f32 %v491, %v491
    %v494 = vsub.f32 %v492, %v493
    %v495 = vmax.f32 %v494, 0.0
    %v496 = vadd.f32 %v495, 1e-05
    %v497 = vrsqrt.pop %v496
    %v498 = vmul.f32 %v475, %v497
    %v499 = vmul.f32 %v491, %v498
    %v500 = vsub.f32 %v476, %v499
    %502 = vset.pattern.permute.xlu0 0
    %503 = vperm.xlu0 %502, %v498
    %v504 = vpop.permute.xlu0 %503
    %v506 = vmul.f32 %v400, %v504
    %v507 = vmul.f32 %v402, %v504
    %v508 = vmul.f32 %v471, %v504
    %v509 = vmul.f32 %v473, %v504
    %511 = vset.pattern.permute.xlu0 0
    %512 = vperm.xlu0 %511, %v500
    %v513 = vpop.permute.xlu0 %512
    %v515 = vadd.f32 %v506, %v513
    %v516 = vadd.f32 %v507, %v513
    %v517 = vadd.f32 %v508, %v513
    %v518 = vadd.f32 %v509, %v513
    %v519 = vmax.f32 %v515, 0.0
    %v520 = vmax.f32 %v516, 0.0
    %v521 = vmax.f32 %v517, 0.0
    %v522 = vmax.f32 %v518, 0.0
    %vm523 = vcmask 64512
    %v525 = vsel %vm523, %v55, 0
    %v528 = vsel %vm523, %v56, 0
    %530 = vmatprep.subr.mxu0 %v520
    %531 = vmatpush1.msra.mxu0 %v519
    %532 = vmatprep.subr.mxu0 0.0
    %533 = vmatpush1.msra.mxu0 0.0
    %534 = vmatprep.subr.mxu0 0.0
    %535 = vmatpush1.msra.mxu0 0.0
    %536 = vmatprep.subr.mxu0 0.0
    %537 = vmatpush1.msra.mxu0 0.0
    %538 = vmatprep.subr.mxu0 0.0
    %539 = vmatpush1.msra.mxu0 0.0
    %540 = vmatprep.subr.mxu0 0.0
    %541 = vmatpush1.msra.mxu0 0.0
    %542 = vmatprep.subr.mxu0 0.0
    %543 = vmatpush1.msra.mxu0 0.0
    %544 = vmatprep.subr.mxu0 0.0
    %545 = vmatpush1.msra.mxu0 0.0
    %546 = vmatprep.subr.mxu0 0.0
    %547 = vmatpush1.msra.mxu0 0.0
    %548 = vmatprep.subr.mxu0 0.0
    %549 = vmatpush1.msra.mxu0 0.0
    %550 = vmatprep.subr.mxu0 0.0
    %551 = vmatpush1.msra.mxu0 0.0
    %552 = vmatprep.subr.mxu0 0.0
    %553 = vmatpush1.msra.mxu0 0.0
    %554 = vmatprep.subr.mxu0 0.0
    %555 = vmatpush1.msra.mxu0 0.0
    %556 = vmatprep.subr.mxu0 0.0
    %557 = vmatpush1.msra.mxu0 0.0
    %558 = vmatprep.subr.mxu0 0.0
    %559 = vmatpush1.msra.mxu0 0.0
    %560 = vmatprep.subr.mxu0 0.0
    %561 = vmatpush1.msra.mxu0 0.0
    %562 = vmatprep.subr.mxu0 0.0
    %563 = vmatpush1.msra.mxu0 0.0
    %564 = vmatprep.subr.mxu0 0.0
    %565 = vmatpush1.msra.mxu0 0.0
    %566 = vmatprep.subr.mxu0 0.0
    %567 = vmatpush1.msra.mxu0 0.0
    %568 = vmatprep.subr.mxu0 0.0
    %569 = vmatpush1.msra.mxu0 0.0
    %570 = vmatprep.subr.mxu0 0.0
    %571 = vmatpush1.msra.mxu0 0.0
    %572 = vmatprep.subr.mxu0 0.0
    %573 = vmatpush1.msra.mxu0 0.0
    %574 = vmatprep.subr.mxu0 0.0
    %575 = vmatpush1.msra.mxu0 0.0
    %576 = vmatprep.subr.mxu0 0.0
    %577 = vmatpush1.msra.mxu0 0.0
    %578 = vmatprep.subr.mxu0 0.0
    %579 = vmatpush1.msra.mxu0 0.0
    %580 = vmatprep.subr.mxu0 0.0
    %581 = vmatpush1.msra.mxu0 0.0
    %582 = vmatprep.subr.mxu0 0.0
    %583 = vmatpush1.msra.mxu0 0.0
    %584 = vmatprep.subr.mxu0 0.0
    %585 = vmatpush1.msra.mxu0 0.0
    %586 = vmatprep.subr.mxu0 0.0
    %587 = vmatpush1.msra.mxu0 0.0
    %588 = vmatprep.subr.mxu0 0.0
    %589 = vmatpush1.msra.mxu0 0.0
    %590 = vmatprep.subr.mxu0 0.0
    %591 = vmatpush1.msra.mxu0 0.0
    %592 = vmatprep.subr.mxu0 0.0
    %593 = vmatpush1.msra.mxu0 0.0
    %594 = vmatprep.mubr.f32.mxu0 0.0
    %595 = vmatmul.mubr.f32.gmra.mrb[0].mxu0 %v525
    %v596 = vpop.f32.mrb[0].mxu0
    %v597 = vadd.f32 0.0, %v596
    %v598 = vpop.f32.mrb[0].mxu0
    %v599 = vadd.f32 0.0, %v598
    %600 = vmatprep.mubr.f32.mxu0 0.0
    %601 = vmatmul.mubr.f32.gmra.mrb[0].mxu0 %v528
    %v602 = vpop.f32.mrb[0].mxu0
    %v603 = vadd.f32 0.0, %v602
    %v604 = vpop.f32.mrb[0].mxu0
    %v605 = vadd.f32 0.0, %v604
    %606 = vdwg.mxu0
    %607 = vmatprep.subr.mxu0 %v522
    %608 = vmatpush1.msra.mxu0 %v521
    %609 = vmatprep.subr.mxu0 0.0
    %610 = vmatpush1.msra.mxu0 0.0
    %611 = vmatprep.subr.mxu0 0.0
    %612 = vmatpush1.msra.mxu0 0.0
    %613 = vmatprep.subr.mxu0 0.0
    %614 = vmatpush1.msra.mxu0 0.0
    %615 = vmatprep.subr.mxu0 0.0
    %616 = vmatpush1.msra.mxu0 0.0
    %617 = vmatprep.subr.mxu0 0.0
    %618 = vmatpush1.msra.mxu0 0.0
    %619 = vmatprep.subr.mxu0 0.0
    %620 = vmatpush1.msra.mxu0 0.0
    %621 = vmatprep.subr.mxu0 0.0
    %622 = vmatpush1.msra.mxu0 0.0
    %623 = vmatprep.subr.mxu0 0.0
    %624 = vmatpush1.msra.mxu0 0.0
    %625 = vmatprep.subr.mxu0 0.0
    %626 = vmatpush1.msra.mxu0 0.0
    %627 = vmatprep.subr.mxu0 0.0
    %628 = vmatpush1.msra.mxu0 0.0
    %629 = vmatprep.subr.mxu0 0.0
    %630 = vmatpush1.msra.mxu0 0.0
    %631 = vmatprep.subr.mxu0 0.0
    %632 = vmatpush1.msra.mxu0 0.0
    %633 = vmatprep.subr.mxu0 0.0
    %634 = vmatpush1.msra.mxu0 0.0
    %635 = vmatprep.subr.mxu0 0.0
    %636 = vmatpush1.msra.mxu0 0.0
    %637 = vmatprep.subr.mxu0 0.0
    %638 = vmatpush1.msra.mxu0 0.0
    %639 = vmatprep.subr.mxu0 0.0
    %640 = vmatpush1.msra.mxu0 0.0
    %641 = vmatprep.subr.mxu0 0.0
    %642 = vmatpush1.msra.mxu0 0.0
    %643 = vmatprep.subr.mxu0 0.0
    %644 = vmatpush1.msra.mxu0 0.0
    %645 = vmatprep.subr.mxu0 0.0
    %646 = vmatpush1.msra.mxu0 0.0
    %647 = vmatprep.subr.mxu0 0.0
    %648 = vmatpush1.msra.mxu0 0.0
    %649 = vmatprep.subr.mxu0 0.0
    %650 = vmatpush1.msra.mxu0 0.0
    %651 = vmatprep.subr.mxu0 0.0
    %652 = vmatpush1.msra.mxu0 0.0
    %653 = vmatprep.subr.mxu0 0.0
    %654 = vmatpush1.msra.mxu0 0.0
    %655 = vmatprep.subr.mxu0 0.0
    %656 = vmatpush1.msra.mxu0 0.0
    %657 = vmatprep.subr.mxu0 0.0
    %658 = vmatpush1.msra.mxu0 0.0
    %659 = vmatprep.subr.mxu0 0.0
    %660 = vmatpush1.msra.mxu0 0.0
    %661 = vmatprep.subr.mxu0 0.0
    %662 = vmatpush1.msra.mxu0 0.0
    %663 = vmatprep.subr.mxu0 0.0
    %664 = vmatpush1.msra.mxu0 0.0
    %665 = vmatprep.subr.mxu0 0.0
    %666 = vmatpush1.msra.mxu0 0.0
    %667 = vmatprep.subr.mxu0 0.0
    %668 = vmatpush1.msra.mxu0 0.0
    %669 = vmatprep.subr.mxu0 0.0
    %670 = vmatpush1.msra.mxu0 0.0
    %671 = vmatprep.mubr.f32.mxu0 0.0
    %672 = vmatmul.mubr.f32.gmra.mrb[0].mxu0 %v525
    %v673 = vpop.f32.mrb[0].mxu0
    %v674 = vadd.f32 0.0, %v673
    %v675 = vpop.f32.mrb[0].mxu0
    %v676 = vadd.f32 0.0, %v675
    %677 = vmatprep.mubr.f32.mxu0 0.0
    %678 = vmatmul.mubr.f32.gmra.mrb[0].mxu0 %v528
    %v679 = vpop.f32.mrb[0].mxu0
    %v680 = vadd.f32 0.0, %v679
    %v681 = vpop.f32.mrb[0].mxu0
    %v682 = vadd.f32 0.0, %v681
    %683 = vdwg.mxu0
    %v684 = vld [vmem:[%s10] sm:$0xff]
    %v685 = vld [vmem:[%s10 + $0x8] sm:$0xff]
    %v686 = vld [vmem:[%s11] sm:$0xff]
    %v687 = vld [vmem:[%s11 + $0x8] sm:$0xff]
    %v688 = vadd.f32 %v597, %v599
    %v689 = vadd.f32 %v688, %v674
    %v690 = vadd.f32 %v689, %v676
    %691 = vadd.xlane.f32.xlu0 %v690
    %v692 = vpop.xlane.xlu0 %691
    %v693 = vadd.f32 %v603, %v605
    %v694 = vadd.f32 %v693, %v680
    %v695 = vadd.f32 %v694, %v682
    %696 = vadd.xlane.f32.xlu0 %v695
    %v697 = vpop.xlane.xlu0 %696
    %v698 = vmul.f32 %v597, %v597
    %v699 = vmul.f32 %v599, %v599
    %v700 = vmul.f32 %v674, %v674
    %v701 = vmul.f32 %v676, %v676
    %v702 = vmul.f32 %v603, %v603
    %v703 = vmul.f32 %v605, %v605
    %v704 = vmul.f32 %v680, %v680
    %v705 = vmul.f32 %v682, %v682
    %v706 = vadd.f32 %v698, %v699
    %v707 = vadd.f32 %v706, %v700
    %v708 = vadd.f32 %v707, %v701
    %709 = vadd.xlane.f32.xlu0 %v708
    %v710 = vpop.xlane.xlu0 %709
    %v711 = vadd.f32 %v702, %v703
    %v712 = vadd.f32 %v711, %v704
    %v713 = vadd.f32 %v712, %v705
    %714 = vadd.xlane.f32.xlu0 %v713
    %v715 = vpop.xlane.xlu0 %714
    %v716 = vmul.f32 %v692, 0.001953125
    %v717 = vmul.f32 %v697, 0.001953125
    %v718 = vmul.f32 %v710, 0.001953125
    %v719 = vmul.f32 %v715, 0.001953125
    %v720 = vmul.f32 %v716, %v716
    %v721 = vmul.f32 %v717, %v717
    %v722 = vsub.f32 %v718, %v720
    %v723 = vsub.f32 %v719, %v721
    %v724 = vmax.f32 %v722, 0.0
    %v725 = vmax.f32 %v723, 0.0
    %v726 = vadd.f32 %v724, 1e-05
    %v727 = vadd.f32 %v725, 1e-05
    %v728 = vrsqrt.pop %v726
    %v729 = vrsqrt.pop %v727
    %v730 = vmul.f32 %v684, %v728
    %v731 = vmul.f32 %v685, %v729
    %v732 = vmul.f32 %v716, %v730
    %v733 = vmul.f32 %v717, %v731
    %v734 = vsub.f32 %v686, %v732
    %v735 = vsub.f32 %v687, %v733
    %737 = vset.pattern.permute.xlu0 0
    %738 = vperm.xlu0 %737, %v730
    %v739 = vpop.permute.xlu0 %738
    %742 = vset.pattern.permute.xlu0 0
    %743 = vperm.xlu0 %742, %v731
    %v744 = vpop.permute.xlu0 %743
    %v746 = vmul.f32 %v597, %v739
    %v747 = vmul.f32 %v599, %v739
    %v748 = vmul.f32 %v674, %v739
    %v749 = vmul.f32 %v676, %v739
    %v750 = vmul.f32 %v603, %v744
    %v751 = vmul.f32 %v605, %v744
    %v752 = vmul.f32 %v680, %v744
    %v753 = vmul.f32 %v682, %v744
    %755 = vset.pattern.permute.xlu0 0
    %756 = vperm.xlu0 %755, %v734
    %v757 = vpop.permute.xlu0 %756
    %760 = vset.pattern.permute.xlu0 0
    %761 = vperm.xlu0 %760, %v735
    %v762 = vpop.permute.xlu0 %761
    %v764 = vadd.f32 %v746, %v757
    %v765 = vadd.f32 %v747, %v757
    %v766 = vadd.f32 %v748, %v757
    %v767 = vadd.f32 %v749, %v757
    %v768 = vadd.f32 %v750, %v762
    %v769 = vadd.f32 %v751, %v762
    %v770 = vadd.f32 %v752, %v762
    %v771 = vadd.f32 %v753, %v762
    %v772 = vadd.f32 %v42, %v764
    %v773 = vadd.f32 %v43, %v765
    %v774 = vadd.f32 %v44, %v768
    %v775 = vadd.f32 %v45, %v769
    %776 = vst [vmem:[#allocation2] sm:$0xff] %v772
    %777 = vst [vmem:[#allocation2 + $0x8] sm:$0xff] %v773
    %778 = vst [vmem:[#allocation2 + $0x10] sm:$0xff] %v774
    %779 = vst [vmem:[#allocation2 + $0x18] sm:$0xff] %v775
    %v780 = vld [vmem:[%s46] sm:$0xff]
    %v781 = vld [vmem:[%s46 + $0x8] sm:$0xff]
    %v782 = vld [vmem:[%s46 + $0x10] sm:$0xff]
    %v783 = vld [vmem:[%s46 + $0x18] sm:$0xff]
    %v784 = vadd.f32 %v780, %v766
    %v785 = vadd.f32 %v781, %v767
    %v786 = vadd.f32 %v782, %v770
    %v787 = vadd.f32 %v783, %v771
    %s788 = scalar_lea.vmem [#allocation2], 32
    %789 = vst [vmem:[%s788] sm:$0xff] %v784
    %790 = vst [vmem:[%s788 + $0x8] sm:$0xff] %v785
    %791 = vst [vmem:[%s788 + $0x10] sm:$0xff] %v786
    %792 = vst [vmem:[%s788 + $0x18] sm:$0xff] %v787
    // Predicated region
    $region50: #{residual_bottleneck_pallas.1} parent=1 // pred_check
      _
    $region51: #{residual_bottleneck_pallas.1} parent=1 // pred_check_branch
      %794 = sbr.rel (0) target = $region53
    $region52: #{residual_bottleneck_pallas.1} parent=1 // pred_region
      %s796 = ssub.s32 1024, 1024
      %797 = vsyncadd [#allocation3], %s796
      %s798 = sshll.u32 [#allocation2], 4
      %s799 = int_to_ptr.vmem [resolvable:$true] %s798
      %804 = dma.vmem_to_hbm [thread:$0]  %s799, 1024, %s12, [#allocation3], 256, 256, 16
    $region53: #{residual_bottleneck_pallas.1} parent=1 // pred_fallthru
      _
    // Predicated region
    $region54: #{residual_bottleneck_pallas.1} parent=1 // pred_check
      _
    $region55: #{residual_bottleneck_pallas.1} parent=1 // pred_check_branch
      %806 = sbr.rel (0) target = $region57
    $region56: #{residual_bottleneck_pallas.1} parent=1 // pred_region
      %807 = dma.done [#allocation3], 1024
    $region57: #{residual_bottleneck_pallas.1} parent=1 // pred_fallthru
      _
    %808 = vsyncpa [#allocation3], 1

</llo_original>
